<compile_context>
chip_gen: v6e
topology: v6e:2x2x1
jax: 0.10.0
libtpu: 0.0.40
codegen_flags: <defaults>
</compile_context>

<pallas_src>
import functools

import jax
import jax.numpy as jnp
from jax import lax
from jax.experimental import pallas as pl
from jax.experimental.pallas import tpu as pltpu


def _round_up(a, b):
    return ((a + b - 1) // b) * b


def _cdiv(a, b):
    return -(-a // b)


def _dropout_kernel(seed_ref, x_ref, o_ref, *, threshold, scale):
    shape = x_ref.shape  # (bm, BN) block
    # Global flat element index -> the mask is independent of BN/bm/grid choices.
    r = lax.broadcasted_iota(jnp.int32, shape, 0)
    c = lax.broadcasted_iota(jnp.int32, shape, 1)
    idx = ((pl.program_id(0) * shape[0] + r) * shape[1] + c).astype(jnp.uint32)

    # Counter-based hash PRNG (Wellons lowbias32 variant) keyed by the seed.
    # Pure integer VPU ops: runs on TPU hardware and in interpret mode alike.
    s = seed_ref[0].astype(jnp.uint32) * jnp.uint32(0x9E3779B9)
    h = idx * jnp.uint32(0x9E3779B1) + s
    h ^= h >> 16
    h *= jnp.uint32(0x21F0AAAD)
    h ^= h >> 15
    h *= jnp.uint32(0x735A2D97)
    h ^= h >> 15

    # keep  <=>  uniform(bits / 2^32) > p  <=>  bits > p * 2^32
    keep = h > jnp.uint32(threshold)
    xs = x_ref[...] * jnp.asarray(scale, x_ref.dtype)   # native-dtype math (no upcast)
    o_ref[...] = jnp.where(keep, xs, jnp.zeros_like(xs))


@functools.partial(jax.jit, static_argnames=("p", "training"))
def dropout(x, seed, *, p, training=True):
    """Pallas TPU dropout matching the reference nn.Module forward."""
    if (not training) or p == 0.0:
        return x                       # eval mode (or p == 0): identity
    if p >= 1.0:
        return jnp.zeros_like(x)       # everything dropped; avoid 1/(1-p) blow-up

    orig_shape = x.shape
    total = x.size
    itemsize = jnp.dtype(x.dtype).itemsize

    # ---- copy-free lane-dense 2-D view (rows, BN), BN a multiple of 128 ----------
    BN = None
    for cand in (1024, 512, 256, 128):
        if total % cand == 0 and total // cand >= 8:
            BN = cand
            break
    if BN is None:
        for cand in (1024, 512, 256, 128):
            if total % cand == 0:
                BN = cand
                break
    pad = 0
    if BN is None:
        # TODO(synk): ragged tail path to avoid this pad copy for element counts
        # that are not a multiple of 128 (rare); common shapes take the copy-free path.
        BN = 128
        pad = _round_up(total, BN) - total
    rows = (total + pad) // BN

    flat = x.reshape(-1)
    if pad:
        flat = jnp.pad(flat, (0, pad))
    x2d = flat.reshape(rows, BN)

    # ---- block sizing: <=2 MiB/buffer (4 buffers ~= 8 MiB -> fits v5e's 16 MiB
    # scoped default and v7x's 32 MiB); >=2 roughly-equal tiles for v7x's two TCs ----
    max_bm = max(8, ((2 * 1024 * 1024) // (BN * itemsize)) // 8 * 8)
    if rows <= 8:
        bm = rows                      # block dim == full array dim (allowed)
    else:
        n_tiles = max(2, _cdiv(rows, max_bm))
        bm = min(max_bm, _round_up(_cdiv(rows, n_tiles), 8))
    grid = (_cdiv(rows, bm),)          # partial final block handled by Pallas

    threshold = min(int(p * 4294967296.0), 4294967295)
    scale = 1.0 / (1.0 - p)
    seed_arr = jnp.atleast_1d(jnp.asarray(seed, dtype=jnp.int32))

    out2d = pl.pallas_call(
        functools.partial(_dropout_kernel, threshold=threshold, scale=scale),
        out_shape=jax.ShapeDtypeStruct((rows, BN), x.dtype),
        grid_spec=pltpu.PrefetchScalarGridSpec(
            num_scalar_prefetch=1,     # seed lands in SMEM
            grid=grid,
            in_specs=[pl.BlockSpec((bm, BN), lambda i, seed: (i, 0))],
            out_specs=pl.BlockSpec((bm, BN), lambda i, seed: (i, 0)),
        ),
        compiler_params=pltpu.CompilerParams(
            dimension_semantics=("parallel",)),   # v7x: shard tiles across both TCs
        cost_estimate=pl.CostEstimate(
            flops=2 * rows * BN,
            transcendentals=0,
            bytes_accessed=2 * rows * BN * itemsize),
    )(seed_arr, x2d)

    out = out2d.reshape(-1)
    if pad:
        out = out[:total]
    return out.reshape(orig_shape)


if __name__ == "__main__":
    key = jax.random.PRNGKey(0)
    x = jax.random.normal(key, (2, 4, 16, 16), jnp.float32)
    p = 0.5

    # Training mode.
    out = dropout(x, 0, p=p, training=True)
    jax.block_until_ready(out)

    # Eval mode is identity.
    assert jnp.array_equal(dropout(x, 0, p=p, training=False), x), "eval must be identity"

    # Kept elements are exactly X / (1 - p); dropped elements are exactly 0.
    keep = out != 0.0
    assert jnp.allclose(out[keep], x[keep] / (1.0 - p), rtol=1e-6, atol=1e-6), \
        "kept elements must be scaled by 1/(1-p)"
    frac = float(jnp.mean(keep.astype(jnp.float32)))
    assert 0.35 < frac < 0.65, f"keep fraction {frac} far from 1-p={1 - p}"

    # Determinism: same seed -> same mask; different seed -> different mask.
    assert jnp.array_equal(out, dropout(x, 0, p=p, training=True))
    assert not jnp.array_equal(out, dropout(x, 123, p=p, training=True))

    # bf16 native-dtype path: same mask as f32 for the same seed, exact *2 scaling.
    xb = x.astype(jnp.bfloat16)
    outb = dropout(xb, 0, p=p, training=True)
    keep_b = outb != 0
    assert jnp.array_equal(keep_b, keep), "mask must not depend on dtype"
    assert jnp.array_equal(outb[keep_b], (xb * jnp.bfloat16(2.0))[keep_b])

    # Multi-tile grid with a ragged final block.
    x2 = jax.random.normal(jax.random.PRNGKey(1), (3, 7, 24, 32), jnp.float32)
    out2 = dropout(x2, 7, p=0.3, training=True)
    k2 = out2 != 0.0
    assert jnp.allclose(out2[k2], x2[k2] / 0.7, rtol=1e-6, atol=1e-6)
    f2 = float(jnp.mean(k2.astype(jnp.float32)))
    assert 0.6 < f2 < 0.8, f"keep fraction {f2} far from 0.7"

    print("KERNEL_OK")
</pallas_src>

<mosaic_0001>
module attributes {stable_mosaic.version = 11 : i64} {
  func.func @_dropout_kernel(%arg0: i32, %arg1: memref<1xi32, #tpu.memory_space<smem>>, %arg2: memref<8x256xf32, #tpu.memory_space<vmem>>, %arg3: memref<8x256xf32, #tpu.memory_space<vmem>>) attributes {dimension_semantics = [#tpu.dimension_semantics<parallel>], iteration_bounds = array<i64: 1>, scalar_prefetch = 1 : i64, scratch_operands = 0 : i64, tpu.core_type = #tpu.core_type<tc>, window_params = [{transform_indices = @transform_0, window_bounds = array<i64: 8, 256>}, {transform_indices = @transform_1, window_bounds = array<i64: 8, 256>}]} {
    %0 = tpu.iota {dimensions = array<i32: 0>} : vector<8x256xi32>
    %1 = tpu.iota {dimensions = array<i32: 1>} : vector<8x256xi32>
    %c8_i32 = arith.constant 8 : i32
    %2 = arith.muli %arg0, %c8_i32 : i32
    %3 = vector.broadcast %2 : i32 to vector<8x256xi32>
    %4 = arith.addi %3, %0 : vector<8x256xi32>
    %c256_i32 = arith.constant 256 : i32
    %5 = vector.broadcast %c256_i32 : i32 to vector<8x256xi32>
    %6 = arith.muli %4, %5 : vector<8x256xi32>
    %7 = arith.addi %6, %1 : vector<8x256xi32>
    %c0 = arith.constant 0 : index
    %8 = memref.load %arg1[%c0] : memref<1xi32, #tpu.memory_space<smem>>
    %c-1640531527_i32 = arith.constant -1640531527 : i32
    %9 = arith.muli %8, %c-1640531527_i32 : i32
    %c-1640531535_i32 = arith.constant -1640531535 : i32
    %10 = vector.broadcast %c-1640531535_i32 : i32 to vector<8x256xi32>
    %11 = arith.muli %7, %10 : vector<8x256xi32>
    %12 = vector.broadcast %9 : i32 to vector<8x256xi32>
    %13 = arith.addi %11, %12 : vector<8x256xi32>
    %c16_i32 = arith.constant 16 : i32
    %14 = vector.broadcast %c16_i32 : i32 to vector<8x256xi32>
    %15 = arith.shrui %13, %14 : vector<8x256xi32>
    %16 = arith.xori %13, %15 : vector<8x256xi32>
    %c569420461_i32 = arith.constant 569420461 : i32
    %17 = vector.broadcast %c569420461_i32 : i32 to vector<8x256xi32>
    %18 = arith.muli %16, %17 : vector<8x256xi32>
    %c15_i32 = arith.constant 15 : i32
    %19 = vector.broadcast %c15_i32 : i32 to vector<8x256xi32>
    %20 = arith.shrui %18, %19 : vector<8x256xi32>
    %21 = arith.xori %18, %20 : vector<8x256xi32>
    %c1935289751_i32 = arith.constant 1935289751 : i32
    %22 = vector.broadcast %c1935289751_i32 : i32 to vector<8x256xi32>
    %23 = arith.muli %21, %22 : vector<8x256xi32>
    %c15_i32_0 = arith.constant 15 : i32
    %24 = vector.broadcast %c15_i32_0 : i32 to vector<8x256xi32>
    %25 = arith.shrui %23, %24 : vector<8x256xi32>
    %26 = arith.xori %23, %25 : vector<8x256xi32>
    %c-2147483648_i32 = arith.constant -2147483648 : i32
    %27 = vector.broadcast %c-2147483648_i32 : i32 to vector<8x256xi32>
    %28 = arith.cmpi ugt, %26, %27 : vector<8x256xi32>
    %c0_1 = arith.constant 0 : index
    %c0_2 = arith.constant 0 : index
    %29 = vector.load %arg2[%c0_1, %c0_2] : memref<8x256xf32, #tpu.memory_space<vmem>>, vector<8x256xf32>
    %cst = arith.constant 2.000000e+00 : f32
    %30 = vector.broadcast %cst : f32 to vector<8x256xf32>
    %31 = arith.mulf %29, %30 : vector<8x256xf32>
    %cst_3 = arith.constant 0.000000e+00 : f32
    %32 = vector.broadcast %cst_3 : f32 to vector<8x256xf32>
    %33 = arith.select %28, %31, %32 : vector<8x256xi1>, vector<8x256xf32>
    %c0_4 = arith.constant 0 : index
    %c0_5 = arith.constant 0 : index
    %34 = vector.load %arg3[%c0_4, %c0_5] : memref<8x256xf32, #tpu.memory_space<vmem>>, vector<8x256xf32>
    tpu.vector_store %arg3[%c0_4, %c0_5], %33 {strides = array<i32>} : memref<8x256xf32, #tpu.memory_space<vmem>>, vector<8x256xf32>,
    return
  }
  func.func @transform_0(%arg0: i32, %arg1: memref<1xi32, #tpu.memory_space<smem>>) -> (i32, i32) {
    %c0_i32 = arith.constant 0 : i32
    %c0_i32_0 = arith.constant 0 : i32
    return %arg0, %c0_i32 : i32, i32
  }
  func.func @transform_1(%arg0: i32, %arg1: memref<1xi32, #tpu.memory_space<smem>>) -> (i32, i32) {
    %c0_i32 = arith.constant 0 : i32
    %c0_i32_0 = arith.constant 0 : i32
    return %arg0, %c0_i32 : i32, i32
  }
}

</mosaic_0001>

<llo_original>
// kernel: dropout.1
$region0: #{dropout.1}
  #allocation0 [shape = 'u32[]', space=smem, size = 0x4, offset = 0x4, fixed_abs, tag = 'smem constant byte address 0x4 - core index']
  #allocation1 [shape = 'u32[144,128]{1,0:T(1,128)}', space=vmem, size = 0x12000, scoped, tag = 'internal scratch']
  #allocation2 [shape = 's32[1]{0}', space=sflag, size = 0x4, scoped, tag = 'scoped memory for dropout.1']
  #allocation3 [shape = 's32[1]{0:T(128)S(6)}', space=smem, size = 0x200, scoped, tag = 'prefetched SMEM operand 0']
  %s0 = inlined_call_operand.<no memory space> [shape: s32[1], index: 0, kind: input, shape index: {}]
  %s1 = inlined_call_operand.vmem [shape: f32[8,256], index: 1, kind: input, shape index: {}]
  %s2 = inlined_call_operand.vmem [shape: f32[8,256], index: 2, kind: output, shape index: {}]
  %s3 = sld [smem:[#allocation0]]
  $region14: #{dropout.1} parent=0
    _
  %s5 = ssub.s32 1, %s3
  %s6 = scalar_select 0, %s5, %s3
  %7 = sst [smem:[#allocation3]] %s0
  // Predicated region
  $region2: #{dropout.1} parent=0 // pred_check
    _
  $region3: #{dropout.1} parent=0 // pred_check_branch
    %9 = sbr.rel (0) target = $region5
  $region4: #{dropout.1} parent=0 // pred_region
    _
  $region5: #{dropout.1} parent=0 // pred_fallthru
    _
  %v10 = vlaneseq
  %v11 = vshrl.u32 %v10, 7
  %v12 = vlaneseq
  %v13 = vand.u32 %v12, 127
  %v14 = vadd.s32 %v13, 128
  %s15 = smul.u32 0, 8
  %v16 = vstv %s15
  %v17 = vadd.s32 %v16, %v11
  %v18 = vmul.u32 %v17, 256
  %v19 = vadd.s32 %v18, %v13
  %v20 = vadd.s32 %v18, %v14
  %s21 = sld [smem:[#allocation3]]
  %s22 = smul.u32 %s21, 2654435769
  %v23 = vmul.u32 %v19, 2654435761
  %v24 = vmul.u32 %v20, 2654435761
  %v25 = vstv %s22
  %v26 = vadd.s32 %v23, %v25
  %v27 = vadd.s32 %v24, %v25
  %v28 = vshrl.u32 %v26, 16
  %v29 = vshrl.u32 %v27, 16
  %v30 = vxor.u32 %v26, %v28
  %v31 = vxor.u32 %v27, %v29
  %v32 = vmul.u32 %v30, 569420461
  %v33 = vmul.u32 %v31, 569420461
  %v34 = vshrl.u32 %v32, 15
  %v35 = vshrl.u32 %v33, 15
  %v36 = vxor.u32 %v32, %v34
  %v37 = vxor.u32 %v33, %v35
  %v38 = vmul.u32 %v36, 1935289751
  %v39 = vmul.u32 %v37, 1935289751
  %v40 = vshrl.u32 %v38, 15
  %v41 = vshrl.u32 %v39, 15
  %v42 = vxor.u32 %v38, %v40
  %v43 = vxor.u32 %v39, %v41
  %vm44 = vcmp.gt.u32.totalorder %v42, 2147483648
  %vm45 = vcmp.gt.u32.totalorder %v43, 2147483648
  %v46 = vld [vmem:[%s1] sm:$0xff]
  %v47 = vld [vmem:[%s1 + $0x8] sm:$0xff]
  %v48 = vmul.f32 %v46, 2.0
  %v49 = vmul.f32 %v47, 2.0
  %v50 = vsel %vm44, %v48, 0.0
  %v51 = vsel %vm45, %v49, 0.0
  %52 = vst [vmem:[%s2] sm:$0xff] %v50
  %53 = vst [vmem:[%s2 + $0x8] sm:$0xff] %v51
  // Predicated region
  $region6: #{dropout.1} parent=0 // pred_check
    _
  $region7: #{dropout.1} parent=0 // pred_check_branch
    %55 = sbr.rel (0) target = $region9
  $region8: #{dropout.1} parent=0 // pred_region
    _
  $region9: #{dropout.1} parent=0 // pred_fallthru
    _
  // Predicated region
  $region10: #{dropout.1} parent=0 // pred_check
    _
  $region11: #{dropout.1} parent=0 // pred_check_branch
    %57 = sbr.rel (0) target = $region13
  $region12: #{dropout.1} parent=0 // pred_region
    _
  $region13: #{dropout.1} parent=0 // pred_fallthru
    _

</llo_original>
